<compile_context>
chip_gen: v7x
topology: tpu7x:2x2x1
jax: 0.10.0
libtpu: 0.0.40
codegen_flags: <defaults>
</compile_context>

<pallas_src>
import functools

import jax
import jax.numpy as jnp
from jax.experimental import pallas as pl
from jax.experimental.pallas import tpu as pltpu


# Set True on v6e / v7x (bf16 EUP/VPU): halves the SiLU / exp transcendental cost at real
# VAE sizes where the single EUP is the binding slot.  Keep False on v5e (no bf16 EUP) and
# for tight f32 parity with the reference below.
BF16_ACTIVATIONS = False


# ----------------------------- Pallas kernel ---------------------------------

def _encoder_sample_kernel(x_ref, mask_ref, w1_ref, b1_ref, w2_ref, b2_ref, eps_ref,
                           z_ref, im2col_ref, *, c_in, w_img, m, latent, act_bf16):
    """One batch image per grid step.  M = H*W is the lane axis everywhere.

    x_ref     : [C, M]             f32   unpadded image, spatial flattened
    mask_ref  : [3, M]             f32   column-validity masks for sw = dw-1 in {-1,0,+1}
    w1_ref    : [hidden, 9*C]      bf16  conv3x3 weight, column order k*C + c (k = kh*3+kw)
    b1_ref    : [hidden, 1]        f32
    w2_ref    : [2*latent, hidden] bf16  fused (z_mu ; log_var) 1x1 weights
    b2_ref    : [2*latent, 1]      f32
    eps_ref   : [latent, M]        bf16  reparameterization noise
    z_ref     : [latent, M]        f32   output sample
    im2col_ref: [9*C, M]           bf16  VMEM scratch for the in-kernel im2col
    """
    x = x_ref[...]                                    # [C, M] f32 -- one read of x total

    # ---- in-kernel im2col: 9 shifted copies of the image -------------------------------
    # Patch (dh, dw) at output position (i, j) is x[i+dh-1, j+dw-1] (zero out of bounds).
    # Flattened over m = i*W + j this is a shift by d = (dh-1)*W + (dw-1): vertical OOB is
    # handled by the zero margins left by the slice-store, horizontal OOB (row wrap) by
    # the precomputed per-column mask.
    im2col_ref[...] = jnp.zeros_like(im2col_ref)
    for k in range(9):
        dh, dw = divmod(k, 3)
        d = (dh - 1) * w_img + (dw - 1)
        r0, r1 = k * c_in, (k + 1) * c_in
        if d == 0:
            im2col_ref[r0:r1, :] = x.astype(jnp.bfloat16)
        elif d > 0:
            piece = x[:, d:]                                     # [C, M-d]
            if dw != 1:
                piece = piece * mask_ref[dw:dw + 1, :m - d]      # zero row-wrapped columns
            im2col_ref[r0:r1, :m - d] = piece.astype(jnp.bfloat16)
        else:
            piece = x[:, :m + d]                                 # [C, M+d]
            if dw != 1:
                piece = piece * mask_ref[dw:dw + 1, -d:]
            im2col_ref[r0:r1, -d:] = piece.astype(jnp.bfloat16)

    # ---- conv3x3 as ONE K=9*C MXU matmul (f32 accumulate) + SiLU -----------------------
    h = jnp.dot(w1_ref[...], im2col_ref[...],
                preferred_element_type=jnp.float32) + b1_ref[...]        # [hidden, M]
    if act_bf16:                                       # v6e/v7x: bf16 EUP
        h = h.astype(jnp.bfloat16)
    h = h * jax.nn.sigmoid(h)                          # SiLU

    # ---- fused 1x1 convs: rows [0:latent] -> z_mu, rows [latent:2*latent] -> log_var ---
    z2 = jnp.dot(w2_ref[...], h.astype(jnp.bfloat16),
                 preferred_element_type=jnp.float32) + b2_ref[...]       # [2*latent, M]
    z_mu = z2[:latent, :]
    log_var = jnp.clip(z2[latent:, :], -30.0, 20.0)
    if act_bf16:
        z_sigma = jnp.exp(0.5 * log_var.astype(jnp.bfloat16)).astype(jnp.float32)
    else:
        z_sigma = jnp.exp(0.5 * log_var)

    # reparameterized sample; M % 128 == 0 -> fully unmasked lane-dense stores
    z_ref[...] = (z_mu + eps_ref[...].astype(jnp.float32) * z_sigma).astype(z_ref.dtype)


# ------------------------------- wrapper --------------------------------------

def _column_masks(h_img, w_img):
    """[3, H*W] f32 masks: mask[dw, i*W+j] = 1 iff column j + (dw-1) is inside [0, W)."""
    j = jnp.arange(w_img)
    left = (j >= 1).astype(jnp.float32)            # sw = -1
    mid = jnp.ones((w_img,), jnp.float32)          # sw =  0
    right = (j <= w_img - 2).astype(jnp.float32)   # sw = +1
    return jnp.tile(jnp.stack([left, mid, right], axis=0), (1, h_img))


def stage1_wrapper_forward(x, params, eps):
    """x: [B, C, H, W] f32 (NCHW, like PyTorch); eps: [B, latent, H, W] noise (bf16/f32).

    Returns z = z_mu + eps * z_sigma with shape [B, latent, H, W] (f32)."""
    B, C, H, W = x.shape
    M = H * W                                    # lane axis (256 here, multiple of 128)
    w1t, b1, w2t, b2 = params
    hidden = w1t.shape[0]
    latent = w2t.shape[0] // 2

    # free reshapes only -- no host-side pad / cast materialization passes
    x_flat = x.reshape(B, C, M)
    eps_flat = eps.reshape(B, latent, M)
    masks = _column_masks(H, W)                  # [3, M], tiny, resident across the grid

    kernel = functools.partial(_encoder_sample_kernel, c_in=C, w_img=W, m=M,
                               latent=latent, act_bf16=BF16_ACTIVATIONS)

    # TODO(synk): for real VAE sizes, tile the spatial axis into the grid
    # (grid=(B, M // TILE_N), TILE_N sized for v7x's 64 MiB VMEM), and/or block 2-4 images
    # per grid step when B is large and H*W small; keep >= 2 parallel steps for the 2
    # v7x TensorCores.
    z_flat = pl.pallas_call(
        kernel,
        out_shape=jax.ShapeDtypeStruct((B, latent, M), jnp.float32),
        grid_spec=pltpu.PrefetchScalarGridSpec(
            num_scalar_prefetch=0,
            grid=(B,),
            in_specs=[
                pl.BlockSpec((None, C, M), lambda b: (b, 0, 0)),        # image
                pl.BlockSpec((3, M), lambda b: (0, 0)),                 # column masks
                pl.BlockSpec((hidden, 9 * C), lambda b: (0, 0)),        # conv3x3 weight (T)
                pl.BlockSpec((hidden, 1), lambda b: (0, 0)),            # conv bias
                pl.BlockSpec((2 * latent, hidden), lambda b: (0, 0)),   # fused mu/logvar W
                pl.BlockSpec((2 * latent, 1), lambda b: (0, 0)),        # fused bias
                pl.BlockSpec((None, latent, M), lambda b: (b, 0, 0)),   # eps
            ],
            out_specs=pl.BlockSpec((None, latent, M), lambda b: (b, 0, 0)),
            scratch_shapes=[pltpu.VMEM((9 * C, M), jnp.bfloat16)],      # im2col scratch
        ),
        compiler_params=pltpu.CompilerParams(
            dimension_semantics=("parallel",),
            vmem_limit_bytes=32 * 1024 * 1024),
    )(x_flat, masks, w1t, b1, w2t, b2, eps_flat)

    # already channel-major NCHW; pure (free) reshape, no transpose / crop needed
    return z_flat.reshape(B, latent, H, W)


# ----------------------------- parameter init --------------------------------

def init_params(key, c_in, hidden, latent):
    k1, k2, k3 = jax.random.split(key, 3)
    # conv3x3 weight stored transposed in im2col layout [hidden, 9*c_in];
    # column order is (k = kh*3 + kw) major, input channel c minor: col = k*c_in + c.
    w1t = (jax.random.normal(k1, (hidden, 9 * c_in), jnp.float32) * 0.05).astype(jnp.bfloat16)
    b1 = jnp.zeros((hidden, 1), jnp.float32)
    # fused 1x1 projection: rows [0:latent] -> z_mu, rows [latent:2*latent] -> log_var
    w2t = (jnp.concatenate(
        [jax.random.normal(k2, (latent, hidden), jnp.float32),
         jax.random.normal(k3, (latent, hidden), jnp.float32)], axis=0) * 0.05
    ).astype(jnp.bfloat16)
    b2 = jnp.zeros((2 * latent, 1), jnp.float32)
    return (w1t, b1, w2t, b2)


# --------------------------- pure-JAX reference --------------------------------

def reference_forward(x, params, eps):
    w1t, b1, w2t, b2 = params
    B, C, H, W = x.shape
    latent = w2t.shape[0] // 2
    # mirror the kernel's bf16 quantization of x / h so the check isolates the kernel math
    xq = x.astype(jnp.bfloat16).astype(jnp.float32)
    xp = jnp.pad(xq, ((0, 0), (0, 0), (1, 1), (1, 1)))
    cols = [xp[:, :, dh:dh + H, dw:dw + W] for dh in range(3) for dw in range(3)]
    patches = jnp.stack(cols, axis=1).reshape(B, 9 * C, H * W)    # row order k*C + c
    h = jnp.einsum('ok,bkm->bom', w1t.astype(jnp.float32), patches) + b1[None]
    h = h * jax.nn.sigmoid(h)
    hq = h.astype(jnp.bfloat16).astype(jnp.float32)
    z2 = jnp.einsum('oh,bhm->bom', w2t.astype(jnp.float32), hq) + b2[None]
    z_mu = z2[:, :latent]
    log_var = jnp.clip(z2[:, latent:], -30.0, 20.0)
    z_sigma = jnp.exp(0.5 * log_var)
    z = z_mu + eps.reshape(B, latent, H * W).astype(jnp.float32) * z_sigma
    return z.reshape(B, latent, H, W)


# ----------------------------------- main -------------------------------------

if __name__ == "__main__":
    B, C_IN, H, W = 2, 4, 16, 16
    HIDDEN, LATENT = 32, 8

    key = jax.random.PRNGKey(0)
    kx, kp, ke = jax.random.split(key, 3)

    x = jax.random.normal(kx, (B, C_IN, H, W), jnp.float32)         # NCHW, like PyTorch
    params = init_params(kp, C_IN, HIDDEN, LATENT)
    # deterministic "posterior.sample()" noise; bf16 halves its HBM read in the kernel.
    eps = jax.random.normal(ke, (B, LATENT, H, W), jnp.float32).astype(jnp.bfloat16)

    # TODO(synk): the `stack_input_to_rgb` grayscale->RGB branch depends on the real
    # diffusers VAE encoder; only the generic encode()+sampling() path is implemented here.
    fwd = jax.jit(stage1_wrapper_forward)
    z = jax.block_until_ready(fwd(x, params, eps))

    assert z.shape == (B, LATENT, H, W)
    z_ref = reference_forward(x, params, eps)
    assert bool(jnp.allclose(z, z_ref, rtol=2e-2, atol=2e-2))
    print("KERNEL_OK")
</pallas_src>

<mosaic_0001>
module attributes {stable_mosaic.version = 11 : i64} {
  func.func @_encoder_sample_kernel(%arg0: i32, %arg1: memref<1x4x256xf32, #tpu.memory_space<vmem>>, %arg2: memref<3x256xf32, #tpu.memory_space<vmem>>, %arg3: memref<32x36xbf16, #tpu.memory_space<vmem>>, %arg4: memref<32x1xf32, #tpu.memory_space<vmem>>, %arg5: memref<16x32xbf16, #tpu.memory_space<vmem>>, %arg6: memref<16x1xf32, #tpu.memory_space<vmem>>, %arg7: memref<1x8x256xbf16, #tpu.memory_space<vmem>>, %arg8: memref<1x8x256xf32, #tpu.memory_space<vmem>>, %arg9: memref<36x256xbf16, #tpu.memory_space<vmem>>) attributes {dimension_semantics = [#tpu.dimension_semantics<parallel>], iteration_bounds = array<i64: 2>, scalar_prefetch = 0 : i64, scratch_operands = 1 : i64, tpu.core_type = #tpu.core_type<tc>, window_params = [{transform_indices = @transform_0, window_bounds = array<i64: 1, 4, 256>}, {pipeline_mode = #tpu.pipeline_mode<synchronous>, transform_indices = @transform_1, window_bounds = array<i64: 3, 256>}, {pipeline_mode = #tpu.pipeline_mode<synchronous>, transform_indices = @transform_2, window_bounds = array<i64: 32, 36>}, {pipeline_mode = #tpu.pipeline_mode<synchronous>, transform_indices = @transform_3, window_bounds = array<i64: 32, 1>}, {pipeline_mode = #tpu.pipeline_mode<synchronous>, transform_indices = @transform_4, window_bounds = array<i64: 16, 32>}, {pipeline_mode = #tpu.pipeline_mode<synchronous>, transform_indices = @transform_5, window_bounds = array<i64: 16, 1>}, {transform_indices = @transform_6, window_bounds = array<i64: 1, 8, 256>}, {transform_indices = @transform_7, window_bounds = array<i64: 1, 8, 256>}]} {
    %c0 = arith.constant 0 : index
    %c0_0 = arith.constant 0 : index
    %c0_1 = arith.constant 0 : index
    %0 = vector.load %arg1[%c0, %c0_0, %c0_1] : memref<1x4x256xf32, #tpu.memory_space<vmem>>, vector<1x4x256xf32>
    %1 = vector.shape_cast %0 : vector<1x4x256xf32> to vector<4x256xf32>
    %cst = arith.constant 0.000000e+00 : bf16
    %2 = vector.broadcast %cst : bf16 to vector<36x256xbf16>
    %c0_2 = arith.constant 0 : index
    %c0_3 = arith.constant 0 : index
    %3 = vector.load %arg9[%c0_2, %c0_3] : memref<36x256xbf16, #tpu.memory_space<vmem>>, vector<36x256xbf16>
    tpu.vector_store %arg9[%c0_2, %c0_3], %2 {strides = array<i32>} : memref<36x256xbf16, #tpu.memory_space<vmem>>, vector<36x256xbf16>,
    %4 = vector.extract_strided_slice %1 {offsets = [0, 0], sizes = [4, 239], strides = [1, 1]} : vector<4x256xf32> to vector<4x239xf32>
    %c0_4 = arith.constant 0 : index
    %c17 = arith.constant 17 : index
    %5 = vector.load %arg2[%c0_4, %c17] : memref<3x256xf32, #tpu.memory_space<vmem>>, vector<1x239xf32>
    %6 = vector.broadcast %5 : vector<1x239xf32> to vector<4x239xf32>
    %7 = arith.mulf %4, %6 : vector<4x239xf32>
    %8 = arith.truncf %7 : vector<4x239xf32> to vector<4x239xbf16>
    %c0_5 = arith.constant 0 : index
    %c17_6 = arith.constant 17 : index
    %9 = vector.load %arg9[%c0_5, %c17_6] : memref<36x256xbf16, #tpu.memory_space<vmem>>, vector<4x239xbf16>
    tpu.vector_store %arg9[%c0_5, %c17_6], %8 {strides = array<i32>} : memref<36x256xbf16, #tpu.memory_space<vmem>>, vector<4x239xbf16>,
    %10 = vector.extract_strided_slice %1 {offsets = [0, 0], sizes = [4, 240], strides = [1, 1]} : vector<4x256xf32> to vector<4x240xf32>
    %11 = arith.truncf %10 : vector<4x240xf32> to vector<4x240xbf16>
    %c4 = arith.constant 4 : index
    %c16 = arith.constant 16 : index
    %12 = vector.load %arg9[%c4, %c16] : memref<36x256xbf16, #tpu.memory_space<vmem>>, vector<4x240xbf16>
    tpu.vector_store %arg9[%c4, %c16], %11 {strides = array<i32>} : memref<36x256xbf16, #tpu.memory_space<vmem>>, vector<4x240xbf16>,
    %13 = vector.extract_strided_slice %1 {offsets = [0, 0], sizes = [4, 241], strides = [1, 1]} : vector<4x256xf32> to vector<4x241xf32>
    %c2 = arith.constant 2 : index
    %c15 = arith.constant 15 : index
    %14 = vector.load %arg2[%c2, %c15] : memref<3x256xf32, #tpu.memory_space<vmem>>, vector<1x241xf32>
    %15 = vector.broadcast %14 : vector<1x241xf32> to vector<4x241xf32>
    %16 = arith.mulf %13, %15 : vector<4x241xf32>
    %17 = arith.truncf %16 : vector<4x241xf32> to vector<4x241xbf16>
    %c8 = arith.constant 8 : index
    %c15_7 = arith.constant 15 : index
    %18 = vector.load %arg9[%c8, %c15_7] : memref<36x256xbf16, #tpu.memory_space<vmem>>, vector<4x241xbf16>
    tpu.vector_store %arg9[%c8, %c15_7], %17 {strides = array<i32>} : memref<36x256xbf16, #tpu.memory_space<vmem>>, vector<4x241xbf16>,
    %19 = vector.extract_strided_slice %1 {offsets = [0, 0], sizes = [4, 255], strides = [1, 1]} : vector<4x256xf32> to vector<4x255xf32>
    %c0_8 = arith.constant 0 : index
    %c1 = arith.constant 1 : index
    %20 = vector.load %arg2[%c0_8, %c1] : memref<3x256xf32, #tpu.memory_space<vmem>>, vector<1x255xf32>
    %21 = vector.broadcast %20 : vector<1x255xf32> to vector<4x255xf32>
    %22 = arith.mulf %19, %21 : vector<4x255xf32>
    %23 = arith.truncf %22 : vector<4x255xf32> to vector<4x255xbf16>
    %c12 = arith.constant 12 : index
    %c1_9 = arith.constant 1 : index
    %24 = vector.load %arg9[%c12, %c1_9] : memref<36x256xbf16, #tpu.memory_space<vmem>>, vector<4x255xbf16>
    tpu.vector_store %arg9[%c12, %c1_9], %23 {strides = array<i32>} : memref<36x256xbf16, #tpu.memory_space<vmem>>, vector<4x255xbf16>,
    %25 = arith.truncf %1 : vector<4x256xf32> to vector<4x256xbf16>
    %c16_10 = arith.constant 16 : index
    %c0_11 = arith.constant 0 : index
    %26 = vector.load %arg9[%c16_10, %c0_11] : memref<36x256xbf16, #tpu.memory_space<vmem>>, vector<4x256xbf16>
    tpu.vector_store %arg9[%c16_10, %c0_11], %25 {strides = array<i32>} : memref<36x256xbf16, #tpu.memory_space<vmem>>, vector<4x256xbf16>,
    %27 = vector.extract_strided_slice %1 {offsets = [0, 1], sizes = [4, 255], strides = [1, 1]} : vector<4x256xf32> to vector<4x255xf32>
    %c2_12 = arith.constant 2 : index
    %c0_13 = arith.constant 0 : index
    %28 = vector.load %arg2[%c2_12, %c0_13] : memref<3x256xf32, #tpu.memory_space<vmem>>, vector<1x255xf32>
    %29 = vector.broadcast %28 : vector<1x255xf32> to vector<4x255xf32>
    %30 = arith.mulf %27, %29 : vector<4x255xf32>
    %31 = arith.truncf %30 : vector<4x255xf32> to vector<4x255xbf16>
    %c20 = arith.constant 20 : index
    %c0_14 = arith.constant 0 : index
    %32 = vector.load %arg9[%c20, %c0_14] : memref<36x256xbf16, #tpu.memory_space<vmem>>, vector<4x255xbf16>
    tpu.vector_store %arg9[%c20, %c0_14], %31 {strides = array<i32>} : memref<36x256xbf16, #tpu.memory_space<vmem>>, vector<4x255xbf16>,
    %33 = vector.extract_strided_slice %1 {offsets = [0, 15], sizes = [4, 241], strides = [1, 1]} : vector<4x256xf32> to vector<4x241xf32>
    %c0_15 = arith.constant 0 : index
    %c0_16 = arith.constant 0 : index
    %34 = vector.load %arg2[%c0_15, %c0_16] : memref<3x256xf32, #tpu.memory_space<vmem>>, vector<1x241xf32>
    %35 = vector.broadcast %34 : vector<1x241xf32> to vector<4x241xf32>
    %36 = arith.mulf %33, %35 : vector<4x241xf32>
    %37 = arith.truncf %36 : vector<4x241xf32> to vector<4x241xbf16>
    %c24 = arith.constant 24 : index
    %c0_17 = arith.constant 0 : index
    %38 = vector.load %arg9[%c24, %c0_17] : memref<36x256xbf16, #tpu.memory_space<vmem>>, vector<4x241xbf16>
    tpu.vector_store %arg9[%c24, %c0_17], %37 {strides = array<i32>} : memref<36x256xbf16, #tpu.memory_space<vmem>>, vector<4x241xbf16>,
    %39 = vector.extract_strided_slice %1 {offsets = [0, 16], sizes = [4, 240], strides = [1, 1]} : vector<4x256xf32> to vector<4x240xf32>
    %40 = arith.truncf %39 : vector<4x240xf32> to vector<4x240xbf16>
    %c28 = arith.constant 28 : index
    %c0_18 = arith.constant 0 : index
    %41 = vector.load %arg9[%c28, %c0_18] : memref<36x256xbf16, #tpu.memory_space<vmem>>, vector<4x240xbf16>
    tpu.vector_store %arg9[%c28, %c0_18], %40 {strides = array<i32>} : memref<36x256xbf16, #tpu.memory_space<vmem>>, vector<4x240xbf16>,
    %42 = vector.extract_strided_slice %1 {offsets = [0, 17], sizes = [4, 239], strides = [1, 1]} : vector<4x256xf32> to vector<4x239xf32>
    %c2_19 = arith.constant 2 : index
    %c0_20 = arith.constant 0 : index
    %43 = vector.load %arg2[%c2_19, %c0_20] : memref<3x256xf32, #tpu.memory_space<vmem>>, vector<1x239xf32>
    %44 = vector.broadcast %43 : vector<1x239xf32> to vector<4x239xf32>
    %45 = arith.mulf %42, %44 : vector<4x239xf32>
    %46 = arith.truncf %45 : vector<4x239xf32> to vector<4x239xbf16>
    %c32 = arith.constant 32 : index
    %c0_21 = arith.constant 0 : index
    %47 = vector.load %arg9[%c32, %c0_21] : memref<36x256xbf16, #tpu.memory_space<vmem>>, vector<4x239xbf16>
    tpu.vector_store %arg9[%c32, %c0_21], %46 {strides = array<i32>} : memref<36x256xbf16, #tpu.memory_space<vmem>>, vector<4x239xbf16>,
    %c0_22 = arith.constant 0 : index
    %c0_23 = arith.constant 0 : index
    %48 = vector.load %arg3[%c0_22, %c0_23] : memref<32x36xbf16, #tpu.memory_space<vmem>>, vector<32x36xbf16>
    %c0_24 = arith.constant 0 : index
    %c0_25 = arith.constant 0 : index
    %49 = vector.load %arg9[%c0_24, %c0_25] : memref<36x256xbf16, #tpu.memory_space<vmem>>, vector<36x256xbf16>
    %cst_26 = arith.constant dense<0.000000e+00> : vector<32x256xf32>
    %50 = tpu.matmul %48, %49, %cst_26 {dimension_numbers = #tpu.dot_dimension_numbers<[1], [0], [0], [1], [0, 0, 1, 1], [], []>} : vector<32x36xbf16>, vector<36x256xbf16>, vector<32x256xf32> -> vector<32x256xf32>
    %c0_27 = arith.constant 0 : index
    %c0_28 = arith.constant 0 : index
    %51 = vector.load %arg4[%c0_27, %c0_28] : memref<32x1xf32, #tpu.memory_space<vmem>>, vector<32x1xf32>
    %52 = vector.broadcast %51 : vector<32x1xf32> to vector<32x256xf32>
    %53 = arith.addf %50, %52 : vector<32x256xf32>
    %54 = arith.negf %53 : vector<32x256xf32>
    %55 = math.exp %54 : vector<32x256xf32>
    %cst_29 = arith.constant 1.000000e+00 : f32
    %56 = vector.broadcast %cst_29 : f32 to vector<32x256xf32>
    %57 = arith.addf %56, %55 : vector<32x256xf32>
    %58 = arith.divf %56, %57 : vector<32x256xf32>
    %59 = arith.mulf %53, %58 : vector<32x256xf32>
    %c0_30 = arith.constant 0 : index
    %c0_31 = arith.constant 0 : index
    %60 = vector.load %arg5[%c0_30, %c0_31] : memref<16x32xbf16, #tpu.memory_space<vmem>>, vector<16x32xbf16>
    %61 = arith.truncf %59 : vector<32x256xf32> to vector<32x256xbf16>
    %cst_32 = arith.constant dense<0.000000e+00> : vector<16x256xf32>
    %62 = tpu.matmul %60, %61, %cst_32 {dimension_numbers = #tpu.dot_dimension_numbers<[1], [0], [0], [1], [0, 0, 1, 1], [], []>} : vector<16x32xbf16>, vector<32x256xbf16>, vector<16x256xf32> -> vector<16x256xf32>
    %c0_33 = arith.constant 0 : index
    %c0_34 = arith.constant 0 : index
    %63 = vector.load %arg6[%c0_33, %c0_34] : memref<16x1xf32, #tpu.memory_space<vmem>>, vector<16x1xf32>
    %64 = vector.broadcast %63 : vector<16x1xf32> to vector<16x256xf32>
    %65 = arith.addf %62, %64 : vector<16x256xf32>
    %66 = vector.extract_strided_slice %65 {offsets = [0, 0], sizes = [8, 256], strides = [1, 1]} : vector<16x256xf32> to vector<8x256xf32>
    %67 = vector.extract_strided_slice %65 {offsets = [8, 0], sizes = [8, 256], strides = [1, 1]} : vector<16x256xf32> to vector<8x256xf32>
    %cst_35 = arith.constant -3.000000e+01 : f32
    %cst_36 = arith.constant 2.000000e+01 : f32
    %68 = vector.broadcast %cst_35 : f32 to vector<8x256xf32>
    %69 = arith.maximumf %68, %67 : vector<8x256xf32>
    %70 = vector.broadcast %cst_36 : f32 to vector<8x256xf32>
    %71 = arith.minimumf %70, %69 : vector<8x256xf32>
    %cst_37 = arith.constant 5.000000e-01 : f32
    %72 = vector.broadcast %cst_37 : f32 to vector<8x256xf32>
    %73 = arith.mulf %72, %71 : vector<8x256xf32>
    %74 = math.exp %73 : vector<8x256xf32>
    %c0_38 = arith.constant 0 : index
    %c0_39 = arith.constant 0 : index
    %c0_40 = arith.constant 0 : index
    %75 = vector.load %arg7[%c0_38, %c0_39, %c0_40] : memref<1x8x256xbf16, #tpu.memory_space<vmem>>, vector<1x8x256xbf16>
    %76 = vector.shape_cast %75 : vector<1x8x256xbf16> to vector<8x256xbf16>
    %77 = arith.extf %76 : vector<8x256xbf16> to vector<8x256xf32>
    %78 = arith.mulf %77, %74 : vector<8x256xf32>
    %79 = arith.addf %66, %78 : vector<8x256xf32>
    %c0_41 = arith.constant 0 : index
    %c0_42 = arith.constant 0 : index
    %c0_43 = arith.constant 0 : index
    %80 = vector.load %arg8[%c0_41, %c0_42, %c0_43] : memref<1x8x256xf32, #tpu.memory_space<vmem>>, vector<1x8x256xf32>
    %81 = vector.shape_cast %80 : vector<1x8x256xf32> to vector<8x256xf32>
    %82 = vector.shape_cast %79 : vector<8x256xf32> to vector<1x8x256xf32>
    tpu.vector_store %arg8[%c0_41, %c0_42, %c0_43], %82 {strides = array<i32>} : memref<1x8x256xf32, #tpu.memory_space<vmem>>, vector<1x8x256xf32>,
    return
  }
  func.func @transform_0(%arg0: i32) -> (i32, i32, i32) {
    %c0_i32 = arith.constant 0 : i32
    %c0_i32_0 = arith.constant 0 : i32
    %c0_i32_1 = arith.constant 0 : i32
    return %arg0, %c0_i32, %c0_i32_0 : i32, i32, i32
  }
  func.func @transform_1(%arg0: i32) -> (i32, i32) {
    %c0_i32 = arith.constant 0 : i32
    %c0_i32_0 = arith.constant 0 : i32
    %c0_i32_1 = arith.constant 0 : i32
    return %c0_i32, %c0_i32_0 : i32, i32
  }
  func.func @transform_2(%arg0: i32) -> (i32, i32) {
    %c0_i32 = arith.constant 0 : i32
    %c0_i32_0 = arith.constant 0 : i32
    %c0_i32_1 = arith.constant 0 : i32
    return %c0_i32, %c0_i32_0 : i32, i32
  }
  func.func @transform_3(%arg0: i32) -> (i32, i32) {
    %c0_i32 = arith.constant 0 : i32
    %c0_i32_0 = arith.constant 0 : i32
    %c0_i32_1 = arith.constant 0 : i32
    return %c0_i32, %c0_i32_0 : i32, i32
  }
  func.func @transform_4(%arg0: i32) -> (i32, i32) {
    %c0_i32 = arith.constant 0 : i32
    %c0_i32_0 = arith.constant 0 : i32
    %c0_i32_1 = arith.constant 0 : i32
    return %c0_i32, %c0_i32_0 : i32, i32
  }
  func.func @transform_5(%arg0: i32) -> (i32, i32) {
    %c0_i32 = arith.constant 0 : i32
    %c0_i32_0 = arith.constant 0 : i32
    %c0_i32_1 = arith.constant 0 : i32
    return %c0_i32, %c0_i32_0 : i32, i32
  }
  func.func @transform_6(%arg0: i32) -> (i32, i32, i32) {
    %c0_i32 = arith.constant 0 : i32
    %c0_i32_0 = arith.constant 0 : i32
    %c0_i32_1 = arith.constant 0 : i32
    return %arg0, %c0_i32, %c0_i32_0 : i32, i32, i32
  }
  func.func @transform_7(%arg0: i32) -> (i32, i32, i32) {
    %c0_i32 = arith.constant 0 : i32
    %c0_i32_0 = arith.constant 0 : i32
    %c0_i32_1 = arith.constant 0 : i32
    return %arg0, %c0_i32, %c0_i32_0 : i32, i32, i32
  }
}

</mosaic_0001>

<llo_original>
// kernel: tile.9
$region0: #{tile.9}
  %s0 = inlined_call_operand.vmem [shape: f32[3,16,16], index: 0, kind: input, shape index: {}]
  %s1 = inlined_call_operand.vmem [shape: f32[3,256], index: 1, kind: output, shape index: {}]
  $region1: #{tile.9} parent=0
    #allocation0 [shape = 'u8[8192]{0}', space=vmem, size = 0x2000, scoped, tag = 'scoped mem for output reshape']
    %v2 = vld [vmem:[%s0] ss:$8 sm:$0xf]
    %s3 = smov 48
    %v4 = vld [vmem:[%s0] ss:$8 sm:%s3]
    %vm5 = vcmask 1045508
    %v6 = vsel %vm5, %v4, %v2
    %vm7 = vcmask 130048
    %8 = vst.msk [vmem:[#allocation0] ss:$8 sm:$0x3] %vm7, %v6
    %s9 = scalar_lea.vmem [#allocation0], 4294967281
    %10 = vst.msk [vmem:[%s9] ss:$8 sm:$0xc] %vm7, %v6
    %s11 = scalar_lea.vmem [#allocation0], 4294967266
    %12 = vst.msk [vmem:[%s11] ss:$8 sm:$0x30] %vm7, %v6
    %s13 = scalar_lea.vmem %s0, 7
    %s14 = smov 3
    %v15 = vld [vmem:[%s13] ss:$16 sm:%s14]
    %s16 = scalar_lea.vmem %s0, 87
    %s17 = smov 12
    %v18 = vld [vmem:[%s16] ss:$-24 sm:%s17]
    %vm19 = vcmask 1043458
    %v20 = vsel %vm19, %v18, %v15
    %s21 = scalar_lea.vmem %s0, 4294967263
    %s22 = smov 48
    %v23 = vld [vmem:[%s21] ss:$16 sm:%s22]
    %vm24 = vcmask 1045508
    %v25 = vsel %vm24, %v23, %v20
    %26 = vrot.lane.b32.xlu0 %v25, 112
    %v27 = vpop.permute.xlu0 %26
    %vm28 = vcmask 1048448
    %29 = vst.msk [vmem:[#allocation0] sm:$0x7] %vm28, %v27
    %s30 = scalar_lea.vmem [#allocation0], 5
    %31 = vst.msk [vmem:[%s30] sm:$0x38] %vm28, %v27
    %s32 = scalar_lea.vmem %s0, 6
    %s33 = smov 3
    %v34 = vld [vmem:[%s32] ss:$16 sm:%s33]
    %s35 = scalar_lea.vmem %s0, 86
    %s36 = smov 12
    %v37 = vld [vmem:[%s35] ss:$-24 sm:%s36]
    %vm38 = vcmask 1043458
    %v39 = vsel %vm38, %v37, %v34
    %s40 = scalar_lea.vmem %s0, 4294967262
    %s41 = smov 48
    %v42 = vld [vmem:[%s40] ss:$16 sm:%s41]
    %vm43 = vcmask 1045508
    %v44 = vsel %vm43, %v42, %v39
    %45 = vrot.lane.b32.xlu0 %v44, 96
    %v46 = vpop.permute.xlu0 %45
    %vm47 = vcmask 917248
    %48 = vst.msk [vmem:[#allocation0] sm:$0x7] %vm47, %v46
    %s49 = scalar_lea.vmem [#allocation0], 5
    %50 = vst.msk [vmem:[%s49] sm:$0x38] %vm47, %v46
    %s51 = scalar_lea.vmem %s0, 5
    %s52 = smov 3
    %v53 = vld [vmem:[%s51] ss:$16 sm:%s52]
    %s54 = scalar_lea.vmem %s0, 85
    %s55 = smov 12
    %v56 = vld [vmem:[%s54] ss:$-24 sm:%s55]
    %vm57 = vcmask 1043458
    %v58 = vsel %vm57, %v56, %v53
    %s59 = scalar_lea.vmem %s0, 4294967261
    %s60 = smov 48
    %v61 = vld [vmem:[%s59] ss:$16 sm:%s60]
    %vm62 = vcmask 1045508
    %v63 = vsel %vm62, %v61, %v58
    %64 = vrot.lane.b32.xlu0 %v63, 80
    %v65 = vpop.permute.xlu0 %64
    %vm66 = vcmask 786048
    %67 = vst.msk [vmem:[#allocation0] sm:$0x7] %vm66, %v65
    %s68 = scalar_lea.vmem [#allocation0], 5
    %69 = vst.msk [vmem:[%s68] sm:$0x38] %vm66, %v65
    %s70 = scalar_lea.vmem %s0, 4
    %s71 = smov 3
    %v72 = vld [vmem:[%s70] ss:$16 sm:%s71]
    %s73 = scalar_lea.vmem %s0, 84
    %s74 = smov 12
    %v75 = vld [vmem:[%s73] ss:$-24 sm:%s74]
    %vm76 = vcmask 1043458
    %v77 = vsel %vm76, %v75, %v72
    %s78 = scalar_lea.vmem %s0, 4294967260
    %s79 = smov 48
    %v80 = vld [vmem:[%s78] ss:$16 sm:%s79]
    %vm81 = vcmask 1045508
    %v82 = vsel %vm81, %v80, %v77
    %83 = vrot.lane.b32.xlu0 %v82, 64
    %v84 = vpop.permute.xlu0 %83
    %vm85 = vcmask 654848
    %86 = vst.msk [vmem:[#allocation0] sm:$0x7] %vm85, %v84
    %s87 = scalar_lea.vmem [#allocation0], 5
    %88 = vst.msk [vmem:[%s87] sm:$0x38] %vm85, %v84
    %s89 = scalar_lea.vmem %s0, 3
    %s90 = smov 3
    %v91 = vld [vmem:[%s89] ss:$16 sm:%s90]
    %s92 = scalar_lea.vmem %s0, 83
    %s93 = smov 12
    %v94 = vld [vmem:[%s92] ss:$-24 sm:%s93]
    %vm95 = vcmask 1043458
    %v96 = vsel %vm95, %v94, %v91
    %s97 = scalar_lea.vmem %s0, 4294967259
    %s98 = smov 48
    %v99 = vld [vmem:[%s97] ss:$16 sm:%s98]
    %vm100 = vcmask 1045508
    %v101 = vsel %vm100, %v99, %v96
    %102 = vrot.lane.b32.xlu0 %v101, 48
    %v103 = vpop.permute.xlu0 %102
    %vm104 = vcmask 523648
    %105 = vst.msk [vmem:[#allocation0] sm:$0x7] %vm104, %v103
    %s106 = scalar_lea.vmem [#allocation0], 5
    %107 = vst.msk [vmem:[%s106] sm:$0x38] %vm104, %v103
    %s108 = scalar_lea.vmem %s0, 2
    %s109 = smov 3
    %v110 = vld [vmem:[%s108] ss:$16 sm:%s109]
    %s111 = scalar_lea.vmem %s0, 82
    %s112 = smov 12
    %v113 = vld [vmem:[%s111] ss:$-24 sm:%s112]
    %vm114 = vcmask 1043458
    %v115 = vsel %vm114, %v113, %v110
    %s116 = scalar_lea.vmem %s0, 4294967258
    %s117 = smov 48
    %v118 = vld [vmem:[%s116] ss:$16 sm:%s117]
    %vm119 = vcmask 1045508
    %v120 = vsel %vm119, %v118, %v115
    %121 = vrot.lane.b32.xlu0 %v120, 32
    %v122 = vpop.permute.xlu0 %121
    %vm123 = vcmask 392448
    %124 = vst.msk [vmem:[#allocation0] sm:$0x7] %vm123, %v122
    %s125 = scalar_lea.vmem [#allocation0], 5
    %126 = vst.msk [vmem:[%s125] sm:$0x38] %vm123, %v122
    %s127 = scalar_lea.vmem %s0, 1
    %s128 = smov 3
    %v129 = vld [vmem:[%s127] ss:$16 sm:%s128]
    %s130 = scalar_lea.vmem %s0, 81
    %s131 = smov 12
    %v132 = vld [vmem:[%s130] ss:$-24 sm:%s131]
    %vm133 = vcmask 1043458
    %v134 = vsel %vm133, %v132, %v129
    %s135 = scalar_lea.vmem %s0, 4294967257
    %s136 = smov 48
    %v137 = vld [vmem:[%s135] ss:$16 sm:%s136]
    %vm138 = vcmask 1045508
    %v139 = vsel %vm138, %v137, %v134
    %140 = vrot.lane.b32.xlu0 %v139, 16
    %v141 = vpop.permute.xlu0 %140
    %vm142 = vcmask 261248
    %143 = vst.msk [vmem:[#allocation0] sm:$0x7] %vm142, %v141
    %s144 = scalar_lea.vmem [#allocation0], 5
    %145 = vst.msk [vmem:[%s144] sm:$0x38] %vm142, %v141
    %s147 = sshllo.u32 0, 4
    %v149 = vld [vmem:[#allocation0] sm:%s147]
    %s150 = sshllo.u32 0, 4
    %151 = vst [vmem:[%s1] sm:%s150] %v149
    %s152 = scalar_lea.vmem [#allocation0], 8
    %v153 = vld [vmem:[%s152] sm:%s147]
    %s154 = sshllo.u32 0, 4
    %s155 = scalar_lea.vmem %s1, 4
    %156 = vst [vmem:[%s155] sm:%s154] %v153

// kernel: stage1_wrapper_forward.1
$region0: #{stage1_wrapper_forward.1}
  #allocation0 [shape = 'u32[]', space=smem, size = 0x4, offset = 0x4, fixed_abs, tag = 'smem constant byte address 0x4 - core index']
  #allocation1 [shape = 'u32[144,128]{1,0:T(1,128)}', space=vmem, size = 0x12000, scoped, tag = 'internal scratch']
  #allocation2 [shape = 'bf16[36,256]{1,0:T(8,128)(2,1)}', space=vmem, size = 0x5000, scoped, tag = 'scratch operand']
  %s0 = inlined_call_operand.vmem [shape: f32[2,4,256], index: 0, kind: input, shape index: {}]
  %s1 = inlined_call_operand.vmem [shape: f32[3,256], index: 1, kind: input, shape index: {}]
  %s2 = inlined_call_operand.vmem [shape: bf16[32,36], index: 2, kind: input, shape index: {}]
  %s3 = inlined_call_operand.vmem [shape: f32[32,1], index: 3, kind: input, shape index: {}]
  %s4 = inlined_call_operand.vmem [shape: bf16[16,32], index: 4, kind: input, shape index: {}]
  %s5 = inlined_call_operand.vmem [shape: f32[16,1], index: 5, kind: input, shape index: {}]
  %s6 = inlined_call_operand.vmem [shape: bf16[2,8,256], index: 6, kind: input, shape index: {}]
  %s7 = inlined_call_operand.vmem [shape: f32[2,8,256], index: 7, kind: output, shape index: {}]
  %s8 = sld [smem:[#allocation0]]
  $region61: #{stage1_wrapper_forward.1} parent=0
    _
  %s10 = ssub.s32 1, %s8
  %s11 = scalar_select 0, %s10, %s8
  loop: start=0, step=1, limit=4
  $region2: #{stage1_wrapper_forward.1} parent=0 // loop_pre_header
    _
  $region3: #{stage1_wrapper_forward.1} parent=0 // loop_header
    %s13 = sphi 0, %s17
    %p14 = scmp.ge.s32.totalorder %s13, 4
    %s23 = sphi 0, %s25
    %s26 = sphi 0, %s23
    %s27 = sphi 0, %s26
    %s43 = sphi 0, %s27
    %s47 = sphi 0, %s47
    %s49 = sphi 0, %s47
    %s50 = sphi 0, %s49
    %s64 = sphi 0, %s50
    %s68 = sphi 0, %s68
    %s70 = sphi 0, %s68
    %s71 = sphi 0, %s70
    %s85 = sphi 0, %s71
    %s89 = sphi 0, %s89
    %s91 = sphi 0, %s89
    %s92 = sphi 0, %s91
    %s106 = sphi 0, %s92
    %s110 = sphi 0, %s110
    %s112 = sphi 0, %s110
    %s113 = sphi 0, %s112
    %s127 = sphi 0, %s113
    %s131 = sphi 0, %s131
    %s133 = sphi 0, %s131
    %s134 = sphi 0, %s133
    %s148 = sphi 0, %s134
    %s154 = sphi 0, %s156
    %s157 = sphi 0, %s154
    %s158 = sphi 0, %s157
    %s174 = sphi 0, %s158
    %s180 = sphi 0, %s182
    %s183 = sphi 0, %s180
    %s184 = sphi 0, %s183
    %s200 = sphi 0, %s184
  $region4: #{stage1_wrapper_forward.1} parent=0 // loop_header_branch
    %16 = sbr.rel (%p14) target = $region8
  $region5: #{stage1_wrapper_forward.1} parent=0 // loop_body
    %s18 = ssub.s32 %s13, 1
    %s19 = ssub.s32 %s13, 2
    %s20 = sadd.s32 %s13, 1
    %s21 = ssub.s32 %s13, %s20
    %p22 = scmp.eq.s32.totalorder %s21, 0
    %s24 = sadd.s32 %s23, 1
    %s25 = scalar_select %p22, %s23, %s24
    %p28 = pneg %p22
    %p29 = scmp.eq.s32.totalorder %s13, 1
    %p30 = por %p28, %p29
    %p31 = scmp.ne.s32.totalorder %s23, %s26
    %p32 = scmp.eq.s32.totalorder %s13, 0
    %p33 = por %p31, %p32
    %p34 = scmp.ne.s32.totalorder %s23, %s26
    %p35 = scmp.eq.s32.totalorder %s18, 1
    %p36 = por %p34, %p35
    %p37 = scmp.ne.s32.totalorder %s26, %s27
    %p38 = scmp.eq.s32.totalorder %s18, 0
    %p39 = por %p37, %p38
    %p40 = scmp.ne.s32.totalorder %s26, %s27
    %p41 = scmp.eq.s32.totalorder %s19, 1
    %p42 = por %p40, %p41
    %p44 = scmp.ne.s32.totalorder %s27, %s43
    %p45 = scmp.eq.s32.totalorder %s19, 0
    %p46 = por %p44, %p45
    %s48 = sadd.s32 %s47, 1
    %p51 = scmp.eq.s32.totalorder %s13, 1
    %p52 = scmp.ne.s32.totalorder %s47, %s49
    %p53 = scmp.eq.s32.totalorder %s13, 0
    %p54 = por %p52, %p53
    %p55 = scmp.ne.s32.totalorder %s47, %s49
    %p56 = scmp.eq.s32.totalorder %s18, 1
    %p57 = por %p55, %p56
    %p58 = scmp.ne.s32.totalorder %s49, %s50
    %p59 = scmp.eq.s32.totalorder %s18, 0
    %p60 = por %p58, %p59
    %p61 = scmp.ne.s32.totalorder %s49, %s50
    %p62 = scmp.eq.s32.totalorder %s19, 1
    %p63 = por %p61, %p62
    %p65 = scmp.ne.s32.totalorder %s50, %s64
    %p66 = scmp.eq.s32.totalorder %s19, 0
    %p67 = por %p65, %p66
    %s69 = sadd.s32 %s68, 1
    %p72 = scmp.eq.s32.totalorder %s13, 1
    %p73 = scmp.ne.s32.totalorder %s68, %s70
    %p74 = scmp.eq.s32.totalorder %s13, 0
    %p75 = por %p73, %p74
    %p76 = scmp.ne.s32.totalorder %s68, %s70
    %p77 = scmp.eq.s32.totalorder %s18, 1
    %p78 = por %p76, %p77
    %p79 = scmp.ne.s32.totalorder %s70, %s71
    %p80 = scmp.eq.s32.totalorder %s18, 0
    %p81 = por %p79, %p80
    %p82 = scmp.ne.s32.totalorder %s70, %s71
    %p83 = scmp.eq.s32.totalorder %s19, 1
    %p84 = por %p82, %p83
    %p86 = scmp.ne.s32.totalorder %s71, %s85
    %p87 = scmp.eq.s32.totalorder %s19, 0
    %p88 = por %p86, %p87
    %s90 = sadd.s32 %s89, 1
    %p93 = scmp.eq.s32.totalorder %s13, 1
    %p94 = scmp.ne.s32.totalorder %s89, %s91
    %p95 = scmp.eq.s32.totalorder %s13, 0
    %p96 = por %p94, %p95
    %p97 = scmp.ne.s32.totalorder %s89, %s91
    %p98 = scmp.eq.s32.totalorder %s18, 1
    %p99 = por %p97, %p98
    %p100 = scmp.ne.s32.totalorder %s91, %s92
    %p101 = scmp.eq.s32.totalorder %s18, 0
    %p102 = por %p100, %p101
    %p103 = scmp.ne.s32.totalorder %s91, %s92
    %p104 = scmp.eq.s32.totalorder %s19, 1
    %p105 = por %p103, %p104
    %p107 = scmp.ne.s32.totalorder %s92, %s106
    %p108 = scmp.eq.s32.totalorder %s19, 0
    %p109 = por %p107, %p108
    %s111 = sadd.s32 %s110, 1
    %p114 = scmp.eq.s32.totalorder %s13, 1
    %p115 = scmp.ne.s32.totalorder %s110, %s112
    %p116 = scmp.eq.s32.totalorder %s13, 0
    %p117 = por %p115, %p116
    %p118 = scmp.ne.s32.totalorder %s110, %s112
    %p119 = scmp.eq.s32.totalorder %s18, 1
    %p120 = por %p118, %p119
    %p121 = scmp.ne.s32.totalorder %s112, %s113
    %p122 = scmp.eq.s32.totalorder %s18, 0
    %p123 = por %p121, %p122
    %p124 = scmp.ne.s32.totalorder %s112, %s113
    %p125 = scmp.eq.s32.totalorder %s19, 1
    %p126 = por %p124, %p125
    %p128 = scmp.ne.s32.totalorder %s113, %s127
    %p129 = scmp.eq.s32.totalorder %s19, 0
    %p130 = por %p128, %p129
    %s132 = sadd.s32 %s131, 1
    %p135 = scmp.eq.s32.totalorder %s13, 1
    %p136 = scmp.ne.s32.totalorder %s131, %s133
    %p137 = scmp.eq.s32.totalorder %s13, 0
    %p138 = por %p136, %p137
    %p139 = scmp.ne.s32.totalorder %s131, %s133
    %p140 = scmp.eq.s32.totalorder %s18, 1
    %p141 = por %p139, %p140
    %p142 = scmp.ne.s32.totalorder %s133, %s134
    %p143 = scmp.eq.s32.totalorder %s18, 0
    %p144 = por %p142, %p143
    %p145 = scmp.ne.s32.totalorder %s133, %s134
    %p146 = scmp.eq.s32.totalorder %s19, 1
    %p147 = por %p145, %p146
    %p149 = scmp.ne.s32.totalorder %s134, %s148
    %p150 = scmp.eq.s32.totalorder %s19, 0
    %p151 = por %p149, %p150
    %s152 = ssub.s32 %s13, %s20
    %p153 = scmp.eq.s32.totalorder %s152, 0
    %s155 = sadd.s32 %s154, 1
    %s156 = scalar_select %p153, %s154, %s155
    %p159 = pneg %p153
    %p160 = scmp.eq.s32.totalorder %s13, 1
    %p161 = por %p159, %p160
    %p162 = scmp.ne.s32.totalorder %s154, %s157
    %p163 = scmp.eq.s32.totalorder %s13, 0
    %p164 = por %p162, %p163
    %p165 = scmp.ne.s32.totalorder %s154, %s157
    %p166 = scmp.eq.s32.totalorder %s18, 1
    %p167 = por %p165, %p166
    %p168 = scmp.ne.s32.totalorder %s157, %s158
    %p169 = scmp.eq.s32.totalorder %s18, 0
    %p170 = por %p168, %p169
    %p171 = scmp.ne.s32.totalorder %s157, %s158
    %p172 = scmp.eq.s32.totalorder %s19, 1
    %p173 = por %p171, %p172
    %p175 = scmp.ne.s32.totalorder %s158, %s174
    %p176 = scmp.eq.s32.totalorder %s19, 0
    %p177 = por %p175, %p176
    %s178 = ssub.s32 %s13, %s20
    %p179 = scmp.eq.s32.totalorder %s178, 0
    %s181 = sadd.s32 %s180, 1
    %s182 = scalar_select %p179, %s180, %s181
    %p185 = pneg %p179
    %p186 = scmp.eq.s32.totalorder %s13, 1
    %p187 = por %p185, %p186
    %p188 = scmp.ne.s32.totalorder %s180, %s183
    %p189 = scmp.eq.s32.totalorder %s13, 0
    %p190 = por %p188, %p189
    %p191 = scmp.ne.s32.totalorder %s180, %s183
    %p192 = scmp.eq.s32.totalorder %s18, 1
    %p193 = por %p191, %p192
    %p194 = scmp.ne.s32.totalorder %s183, %s184
    %p195 = scmp.eq.s32.totalorder %s18, 0
    %p196 = por %p194, %p195
    %p197 = scmp.ne.s32.totalorder %s183, %s184
    %p198 = scmp.eq.s32.totalorder %s19, 1
    %p199 = por %p197, %p198
    %p201 = scmp.ne.s32.totalorder %s184, %s200
    %p202 = scmp.eq.s32.totalorder %s19, 0
    %p203 = por %p201, %p202
    %p204 = scmp.le.s32.totalorder 1, %s13
    %p205 = scmp.lt.s32.totalorder %s13, 3
    %p206 = pnand %p204, %p205
    %p207 = pneg %p206
    // Predicated region
    $region9: #{stage1_wrapper_forward.1} parent=5 // pred_check
      _
    $region10: #{stage1_wrapper_forward.1} parent=5 // pred_check_branch
      %209 = sbr.rel (%p206) target = $region12
    $region11: #{stage1_wrapper_forward.1} parent=5 // pred_region
      %s210 = ssub.s32 %s13, 1
      // Predicated region
      $region13: #{stage1_wrapper_forward.1} parent=11 // pred_check
        %p211 = pneg %p60
      $region14: #{stage1_wrapper_forward.1} parent=11 // pred_check_branch
        %213 = sbr.rel (%p211) target = $region16
      $region15: #{stage1_wrapper_forward.1} parent=11 // pred_region
        _
      $region16: #{stage1_wrapper_forward.1} parent=11 // pred_fallthru
        _
      // Predicated region
      $region17: #{stage1_wrapper_forward.1} parent=11 // pred_check
        %p214 = pneg %p81
      $region18: #{stage1_wrapper_forward.1} parent=11 // pred_check_branch
        %216 = sbr.rel (%p214) target = $region20
      $region19: #{stage1_wrapper_forward.1} parent=11 // pred_region
        _
      $region20: #{stage1_wrapper_forward.1} parent=11 // pred_fallthru
        _
      // Predicated region
      $region21: #{stage1_wrapper_forward.1} parent=11 // pred_check
        %p217 = pneg %p102
      $region22: #{stage1_wrapper_forward.1} parent=11 // pred_check_branch
        %219 = sbr.rel (%p217) target = $region24
      $region23: #{stage1_wrapper_forward.1} parent=11 // pred_region
        _
      $region24: #{stage1_wrapper_forward.1} parent=11 // pred_fallthru
        _
      // Predicated region
      $region25: #{stage1_wrapper_forward.1} parent=11 // pred_check
        %p220 = pneg %p123
      $region26: #{stage1_wrapper_forward.1} parent=11 // pred_check_branch
        %222 = sbr.rel (%p220) target = $region28
      $region27: #{stage1_wrapper_forward.1} parent=11 // pred_region
        _
      $region28: #{stage1_wrapper_forward.1} parent=11 // pred_fallthru
        _
      // Predicated region
      $region29: #{stage1_wrapper_forward.1} parent=11 // pred_check
        %p223 = pneg %p144
      $region30: #{stage1_wrapper_forward.1} parent=11 // pred_check_branch
        %225 = sbr.rel (%p223) target = $region32
      $region31: #{stage1_wrapper_forward.1} parent=11 // pred_region
        _
      $region32: #{stage1_wrapper_forward.1} parent=11 // pred_fallthru
        _
    $region12: #{stage1_wrapper_forward.1} parent=5 // pred_fallthru
      _
    %p226 = scmp.lt.s32.totalorder %s13, 2
    // Predicated region
    $region33: #{stage1_wrapper_forward.1} parent=5 // pred_check
      %p227 = pneg %p226
    $region34: #{stage1_wrapper_forward.1} parent=5 // pred_check_branch
      %229 = sbr.rel (%p227) target = $region36
    $region35: #{stage1_wrapper_forward.1} parent=5 // pred_region
      // Predicated region
      $region37: #{stage1_wrapper_forward.1} parent=35 // pred_check
        %p230 = pneg %p33
      $region38: #{stage1_wrapper_forward.1} parent=35 // pred_check_branch
        %232 = sbr.rel (%p230) target = $region40
      $region39: #{stage1_wrapper_forward.1} parent=35 // pred_region
        %p233 = scmp.lt.s32.totalorder %s13, 1
        %s234 = scalar_select %p233, %s13, 1
        %s235 = smul.addr %s234, 2
        %s236 = smul.addr %s235, 4
        %s237 = scalar_lea.vmem %s0, %s236
      $region40: #{stage1_wrapper_forward.1} parent=35 // pred_fallthru
        _
      // Predicated region
      $region41: #{stage1_wrapper_forward.1} parent=35 // pred_check
        %p238 = pneg %p164
      $region42: #{stage1_wrapper_forward.1} parent=35 // pred_check_branch
        %240 = sbr.rel (%p238) target = $region44
      $region43: #{stage1_wrapper_forward.1} parent=35 // pred_region
        %p241 = scmp.lt.s32.totalorder %s13, 1
        %s242 = scalar_select %p241, %s13, 1
        %s243 = smul.addr %s242, 2
        %s244 = smul.addr %s243, 4
        %s245 = scalar_lea.vmem %s6, %s244
      $region44: #{stage1_wrapper_forward.1} parent=35 // pred_fallthru
        _
    $region36: #{stage1_wrapper_forward.1} parent=5 // pred_fallthru
      _
    %p246 = scmp.le.s32.totalorder 1, %s13
    %p247 = scmp.lt.s32.totalorder %s13, 3
    %p248 = pnand %p246, %p247
    %p249 = pneg %p248
    // Predicated region
    $region45: #{stage1_wrapper_forward.1} parent=5 // pred_check
      _
    $region46: #{stage1_wrapper_forward.1} parent=5 // pred_check_branch
      %251 = sbr.rel (%p248) target = $region48
    $region47: #{stage1_wrapper_forward.1} parent=5 // pred_region
      %s252 = ssub.s32 %s13, 1
      %p253 = scmp.lt.s32.totalorder %s18, 1
      %s254 = scalar_select %p253, %s18, 1
      %s255 = smul.addr %s254, 2
      %s256 = smul.addr %s255, 4
      %s257 = scalar_lea.vmem %s0, %s256
      %p258 = pneg %p39
      %p259 = pneg %p36
      %p260 = pneg %p60
      %p261 = pneg %p57
      %p262 = pneg %p81
      %p263 = pneg %p78
      %p264 = pneg %p102
      %p265 = pneg %p99
      %p266 = pneg %p123
      %p267 = pneg %p120
      %p268 = pneg %p144
      %p269 = pneg %p141
      %p270 = scmp.lt.s32.totalorder %s18, 1
      %s271 = scalar_select %p270, %s18, 1
      %s272 = smul.addr %s271, 2
      %s273 = smul.addr %s272, 4
      %s274 = scalar_lea.vmem %s6, %s273
      %p275 = pneg %p170
      %p276 = pneg %p167
      %p277 = pneg %p196
      %p278 = pneg %p193
      %p279 = scmp.lt.s32.totalorder %s18, 1
      %s280 = scalar_select %p279, %s18, 1
      %s281 = smul.addr %s280, 2
      %s282 = smul.addr %s281, 8
      %s283 = scalar_lea.vmem %s7, %s282
      %p284 = scmp.lt.s32.totalorder %s18, 1
      %s285 = scalar_select %p284, %s18, 1
      %s286 = smul.addr %s285, 2
      %s287 = smul.addr %s286, 4
      %s288 = scalar_lea.vmem %s0, %s287
      %p289 = scmp.lt.s32.totalorder %s18, 1
      %s290 = scalar_select %p289, %s18, 1
      %s291 = smul.addr %s290, 2
      %s292 = smul.addr %s291, 4
      %s293 = scalar_lea.vmem %s6, %s292
      %p294 = scmp.lt.s32.totalorder %s18, 1
      %s295 = scalar_select %p294, %s18, 1
      %s296 = smul.addr %s295, 2
      %s297 = smul.addr %s296, 8
      %s298 = scalar_lea.vmem %s7, %s297
      %v300 = vld [vmem:[%s288] sm:$0xff]
      %301 = vst [vmem:[#allocation2] sm:$0xff] 0
      %302 = vst [vmem:[#allocation2 + $0x8] sm:$0xff] 0
      %303 = vst [vmem:[#allocation2 + $0x10] sm:$0xff] 0
      %304 = vst [vmem:[#allocation2 + $0x18] sm:$0xff] 0
      %305 = vst [vmem:[#allocation2 + $0x20] sm:$0x33] 0
      %v306 = vld [vmem:[%s1] ss:$4 sm:$0x3]
      %v308 = vlaneseq
      %v309 = vshrl.u32 %v308, 7
      %v310 = vsub.s32 0, %v309
      %v311 = vrot.slane %v306, %v310
      %v312 = vlaneseq
      %v313 = vshrl.u32 %v312, 7
      %v314 = vsub.s32 1, %v313
      %v315 = vrot.slane %v306, %v314
      %v316 = vcombine.low %v311, %v315
      %317 = vrot.lane.b32.xlu0 %v316, 111
      %v318 = vpop.permute.xlu0 %317
      %v319 = vrot.slane %v318, 4
      %vm320 = vcmask 908288
      %v321 = vsel %vm320, %v318, %v319
      %v323 = vmul.f32 %v300, %v321
      %v325 = vcombine.high %v323, %v323
      %v327 = vpack.c.bf16 %v323, %v323
      %v328 = vpack.c.bf16 %v325, %v325
      %v331 = vunpack.c.l.b16 %v327
      %v332 = vunpack.c.l.b16 %v328
      %v333 = vpack.c.b16 %v332, %v331
      %334 = vrot.lane.b32.xlu0 %v333, 17
      %v335 = vpop.permute.xlu0 %334
      %v336 = vrot.slane %v335, 4
      %vm337 = vcmask 138240
      %v338 = vsel %vm337, %v336, %v335
      %vm340 = vcmask 1041544
      %vm341 = vcmask 1045508
      %vm342 = vmor %vm341, %vm340
      %343 = vst.msk [vmem:[#allocation2] sm:$0x33] %vm342, %v338
      %v345 = vcombine.high %v300, %v300
      %v347 = vpack.c.bf16 %v300, %v300
      %v348 = vpack.c.bf16 %v345, %v345
      %v351 = vunpack.c.l.b16 %v347
      %v352 = vunpack.c.l.b16 %v348
      %v353 = vpack.c.b16 %v352, %v351
      %v354 = vrot.slane %v353, 6
      %355 = vrot.lane.b32.xlu0 %v354, 16
      %v356 = vpop.permute.xlu0 %355
      %v357 = vrot.slane %v356, 4
      %vm358 = vcmask 130048
      %v359 = vsel %vm358, %v357, %v356
      %vm361 = vcmask 1043586
      %vm362 = vcmask 1047558
      %vm363 = vmor %vm362, %vm361
      %364 = vst.msk [vmem:[#allocation2] sm:$0xcc] %vm363, %v359
      %s365 = scalar_lea.vmem %s1, 2
      %v366 = vld [vmem:[%s365] ss:$4 sm:$0x3]
      %v368 = vlaneseq
      %v369 = vshrl.u32 %v368, 7
      %v370 = vsub.s32 0, %v369
      %v371 = vrot.slane %v366, %v370
      %v372 = vlaneseq
      %v373 = vshrl.u32 %v372, 7
      %v374 = vsub.s32 1, %v373
      %v375 = vrot.slane %v366, %v374
      %v376 = vcombine.low %v371, %v375
      %377 = vrot.lane.b32.xlu0 %v376, 113
      %v378 = vpop.permute.xlu0 %377
      %v379 = vrot.slane %v378, 4
      %vm380 = vcmask 924672
      %v381 = vsel %vm380, %v378, %v379
      %v383 = vmul.f32 %v300, %v381
      %v385 = vcombine.high %v383, %v383
      %v387 = vpack.c.bf16 %v383, %v383
      %v388 = vpack.c.bf16 %v385, %v385
      %v391 = vunpack.c.l.b16 %v387
      %v392 = vunpack.c.l.b16 %v388
      %v393 = vpack.c.b16 %v392, %v391
      %394 = vrot.lane.b32.xlu0 %v393, 15
      %v395 = vpop.permute.xlu0 %394
      %v396 = vrot.slane %v395, 4
      %vm397 = vcmask 121856
      %v398 = vsel %vm397, %v396, %v395
      %vm400 = vcmask 1041528
      %vm401 = vmor %vm341, %vm400
      %402 = vst.msk [vmem:[#allocation2 + $0x8] sm:$0x33] %vm401, %v398
      %v403 = vld [vmem:[%s1] ss:$4 sm:$0x3]
      %v405 = vlaneseq
      %v406 = vshrl.u32 %v405, 7
      %v407 = vsub.s32 0, %v406
      %v408 = vrot.slane %v403, %v407
      %v409 = vlaneseq
      %v410 = vshrl.u32 %v409, 7
      %v411 = vsub.s32 1, %v410
      %v412 = vrot.slane %v403, %v411
      %v413 = vcombine.low %v408, %v412
      %414 = vrot.lane.b32.xlu0 %v413, 127
      %v415 = vpop.permute.xlu0 %414
      %v416 = vrot.slane %v415, 4
      %vm417 = vcmask 1039360
      %v418 = vsel %vm417, %v415, %v416
      %v420 = vmul.f32 %v300, %v418
      %v422 = vcombine.high %v420, %v420
      %v424 = vpack.c.bf16 %v420, %v420
      %v425 = vpack.c.bf16 %v422, %v422
      %v428 = vunpack.c.l.b16 %v424
      %v429 = vunpack.c.l.b16 %v425
      %v430 = vpack.c.b16 %v429, %v428
      %v431 = vrot.slane %v430, 6
      %432 = vrot.lane.b32.xlu0 %v431, 1
      %v433 = vpop.permute.xlu0 %432
      %v434 = vrot.slane %v433, 4
      %vm435 = vcmask 7168
      %v436 = vsel %vm435, %v434, %v433
      %vm438 = vcmask 1043466
      %vm439 = vmor %vm362, %vm438
      %440 = vst.msk [vmem:[#allocation2 + $0x8] sm:$0xcc] %vm439, %v436
      %442 = vst [vmem:[#allocation2 + $0x10] sm:$0x33] %v353
      %v443 = vld [vmem:[%s365] ss:$4 sm:$0x3]
      %v445 = vlaneseq
      %v446 = vshrl.u32 %v445, 7
      %v447 = vsub.s32 0, %v446
      %v448 = vrot.slane %v443, %v447
      %v449 = vlaneseq
      %v450 = vshrl.u32 %v449, 7
      %v451 = vsub.s32 1, %v450
      %v452 = vrot.slane %v443, %v451
      %v453 = vcombine.low %v448, %v452
      %454 = vrot.lane.b32.xlu0 %v453, 1
      %v455 = vpop.permute.xlu0 %454
      %v456 = vrot.slane %v455, 4
      %vm457 = vcmask 7168
      %v458 = vsel %vm457, %v456, %v455
      %v460 = vmul.f32 %v300, %v458
      %v462 = vcombine.high %v460, %v460
      %v464 = vpack.c.bf16 %v460, %v460
      %v465 = vpack.c.bf16 %v462, %v462
      %v468 = vunpack.c.l.b16 %v464
      %v469 = vunpack.c.l.b16 %v465
      %v470 = vpack.c.b16 %v469, %v468
      %v471 = vrot.slane %v470, 6
      %472 = vrot.lane.b32.xlu0 %v471, 127
      %v473 = vpop.permute.xlu0 %472
      %v474 = vrot.slane %v473, 4
      %vm475 = vcmask 1039360
      %v476 = vsel %vm475, %v473, %v474
      %vm478 = vcmask 1043458
      %vm479 = vcmask 1039366
      %vm480 = vmor %vm479, %vm478
      %481 = vst.msk [vmem:[#allocation2 + $0x10] sm:$0xcc] %vm480, %v476
      %v482 = vld [vmem:[%s1] ss:$4 sm:$0x3]
      %v484 = vlaneseq
      %v485 = vshrl.u32 %v484, 7
      %v486 = vsub.s32 0, %v485
      %v487 = vrot.slane %v482, %v486
      %v488 = vlaneseq
      %v489 = vshrl.u32 %v488, 7
      %v490 = vsub.s32 1, %v489
      %v491 = vrot.slane %v482, %v490
      %v492 = vcombine.low %v487, %v491
      %493 = vrot.lane.b32.xlu0 %v492, 15
      %v494 = vpop.permute.xlu0 %493
      %v495 = vrot.slane %v494, 4
      %vm496 = vcmask 121856
      %v497 = vsel %vm496, %v495, %v494
      %v499 = vmul.f32 %v300, %v497
      %v501 = vcombine.high %v499, %v499
      %v503 = vpack.c.bf16 %v499, %v499
      %v504 = vpack.c.bf16 %v501, %v501
      %v507 = vunpack.c.l.b16 %v503
      %v508 = vunpack.c.l.b16 %v504
      %v509 = vpack.c.b16 %v508, %v507
      %510 = vrot.lane.b32.xlu0 %v509, 113
      %v511 = vpop.permute.xlu0 %510
      %v512 = vrot.slane %v511, 4
      %vm513 = vcmask 924672
      %v514 = vsel %vm513, %v511, %v512
      %vm516 = vcmask 1041408
      %vm517 = vcmask 922628
      %vm518 = vmor %vm517, %vm516
      %519 = vst.msk [vmem:[#allocation2 + $0x18] sm:$0x33] %vm518, %v514
      %520 = vrot.lane.b32.xlu0 %v354, 112
      %v521 = vpop.permute.xlu0 %520
      %v522 = vrot.slane %v521, 4
      %vm523 = vcmask 916480
      %v524 = vsel %vm523, %v521, %v522
      %vm526 = vcmask 916486
      %vm527 = vmor %vm526, %vm478
      %528 = vst.msk [vmem:[#allocation2 + $0x18] sm:$0xcc] %vm527, %v524
      %v529 = vld [vmem:[%s365] ss:$4 sm:$0x3]
      %v531 = vlaneseq
      %v532 = vshrl.u32 %v531, 7
      %v533 = vsub.s32 0, %v532
      %v534 = vrot.slane %v529, %v533
      %v535 = vlaneseq
      %v536 = vshrl.u32 %v535, 7
      %v537 = vsub.s32 1, %v536
      %v538 = vrot.slane %v529, %v537
      %v539 = vcombine.low %v534, %v538
      %540 = vrot.lane.b32.xlu0 %v539, 17
      %v541 = vpop.permute.xlu0 %540
      %v542 = vrot.slane %v541, 4
      %vm543 = vcmask 138240
      %v544 = vsel %vm543, %v542, %v541
      %v546 = vmul.f32 %v300, %v544
      %v548 = vcombine.high %v546, %v546
      %v550 = vpack.c.bf16 %v546, %v546
      %v551 = vpack.c.bf16 %v548, %v548
      %v554 = vunpack.c.l.b16 %v550
      %v555 = vunpack.c.l.b16 %v551
      %v556 = vpack.c.b16 %v555, %v554
      %557 = vrot.lane.b32.xlu0 %v556, 111
      %v558 = vpop.permute.xlu0 %557
      %v559 = vrot.slane %v558, 4
      %vm560 = vcmask 908288
      %v561 = vsel %vm560, %v558, %v559
      %vm563 = vcmask 906244
      %vm564 = vmor %vm563, %vm516
      %565 = vst.msk [vmem:[#allocation2 + $0x20] sm:$0x33] %vm564, %v561
      %v566 = vld [vmem:[%s2] sm:$0xf]
      %v567 = vld [vmem:[%s2 + $0x4] sm:$0xf]
      %v568 = vld [vmem:[%s2 + $0x8] sm:$0xf]
      %v569 = vld [vmem:[%s2 + $0xc] sm:$0xf]
      %v570 = vld [vmem:[#allocation2] sm:$0xff]
      %v571 = vld [vmem:[#allocation2 + $0x8] sm:$0xff]
      %v572 = vld [vmem:[#allocation2 + $0x10] sm:$0xff]
      %v573 = vld [vmem:[#allocation2 + $0x18] sm:$0xff]
      %v574 = vld [vmem:[#allocation2 + $0x20] sm:$0x33]
      %v575 = vld [vmem:[%s3] sm:$0xff]
      %v576 = vld [vmem:[%s3 + $0x8] sm:$0xff]
      %v577 = vld [vmem:[%s3 + $0x10] sm:$0xff]
      %v578 = vld [vmem:[%s3 + $0x18] sm:$0xff]
      %580 = vset.pattern.permute.xlu0 0
      %581 = vperm.xlu0 %580, %v575
      %v582 = vpop.permute.xlu0 %581
      %585 = vset.pattern.permute.xlu0 0
      %586 = vperm.xlu0 %585, %v576
      %v587 = vpop.permute.xlu0 %586
      %590 = vset.pattern.permute.xlu0 0
      %591 = vperm.xlu0 %590, %v577
      %v592 = vpop.permute.xlu0 %591
      %595 = vset.pattern.permute.xlu0 0
      %596 = vperm.xlu0 %595, %v578
      %v597 = vpop.permute.xlu0 %596
      %v603 = vunpack.c.l.b16 %v566
      %v604 = vunpack.c.l.b16 %v567
      %v605 = vunpack.c.l.b16 %v568
      %v606 = vunpack.c.l.b16 %v569
      %v607 = vpack.c.b16 %v604, %v603
      %v608 = vpack.c.b16 %v606, %v605
      %v614 = vunpack.c.l.b16 %v570
      %v615 = vunpack.c.h.b16 %v570
      %v616 = vunpack.c.l.b16 %v571
      %v617 = vunpack.c.h.b16 %v571
      %v618 = vunpack.c.l.b16 %v572
      %v619 = vunpack.c.h.b16 %v572
      %v620 = vunpack.c.l.b16 %v573
      %v621 = vunpack.c.h.b16 %v573
      %v622 = vunpack.c.l.b16 %v574
      %v623 = vunpack.c.h.b16 %v574
      %v624 = vpack.c.b16 %v616, %v614
      %v625 = vpack.c.b16 %v617, %v615
      %v626 = vpack.c.b16 %v620, %v618
      %v627 = vpack.c.b16 %v621, %v619
      %v628 = vpack.c.b16 %v622, %v622
      %v629 = vpack.c.b16 %v623, %v623
      %vm634 = vcmask 293888
      %v636 = vsel %vm634, %v607, 0
      %v639 = vsel %vm634, %v608, 0
      %v642 = vsel %vm516, %v628, 0
      %v645 = vsel %vm516, %v629, 0
      %647 = vmatprep.subr.bf16.mxu0 %v625
      %648 = vmatpush1.bf16.msra.mxu0 %v624
      %649 = vmatprep.subr.bf16.mxu0 %v627
      %650 = vmatpush1.bf16.msra.mxu0 %v626
      %651 = vmatprep.subr.bf16.mxu0 %v645
      %652 = vmatpush1.bf16.msra.mxu0 %v642
      %653 = vmatprep.subr.bf16.mxu0 0
      %654 = vmatpush1.bf16.msra.mxu0 0
      %655 = vmatprep.subr.bf16.mxu0 0
      %656 = vmatpush1.bf16.msra.mxu0 0
      %657 = vmatprep.subr.bf16.mxu0 0
      %658 = vmatpush1.bf16.msra.mxu0 0
      %659 = vmatprep.subr.bf16.mxu0 0
      %660 = vmatpush1.bf16.msra.mxu0 0
      %661 = vmatprep.subr.bf16.mxu0 0
      %662 = vmatpush1.bf16.msra.mxu0 0
      %663 = vmatprep.subr.bf16.mxu0 0
      %664 = vmatpush1.bf16.msra.mxu0 0
      %665 = vmatprep.subr.bf16.mxu0 0
      %666 = vmatpush1.bf16.msra.mxu0 0
      %667 = vmatprep.subr.bf16.mxu0 0
      %668 = vmatpush1.bf16.msra.mxu0 0
      %669 = vmatprep.subr.bf16.mxu0 0
      %670 = vmatpush1.bf16.msra.mxu0 0
      %671 = vmatprep.subr.bf16.mxu0 0
      %672 = vmatpush1.bf16.msra.mxu0 0
      %673 = vmatprep.subr.bf16.mxu0 0
      %674 = vmatpush1.bf16.msra.mxu0 0
      %675 = vmatprep.subr.bf16.mxu0 0
      %676 = vmatpush1.bf16.msra.mxu0 0
      %677 = vmatprep.subr.bf16.mxu0 0
      %678 = vmatpush1.bf16.msra.mxu0 0
      %679 = vmatprep.mubr.bf16.mxu0 0
      %680 = vmatmul.mubr.bf16.gmra.mrb[0].mxu0 %v636
      %v681 = vpop.f32.mrb[0].mxu0
      %v682 = vadd.f32 %v582, %v681
      %v683 = vpop.f32.mrb[0].mxu0
      %v684 = vadd.f32 %v582, %v683
      %v685 = vpop.f32.mrb[0].mxu0
      %v686 = vadd.f32 %v587, %v685
      %v687 = vpop.f32.mrb[0].mxu0
      %v688 = vadd.f32 %v587, %v687
      %689 = vmatprep.mubr.bf16.mxu0 0
      %690 = vmatmul.mubr.bf16.gmra.mrb[0].mxu0 %v639
      %v691 = vpop.f32.mrb[0].mxu0
      %v692 = vadd.f32 %v592, %v691
      %v693 = vpop.f32.mrb[0].mxu0
      %v694 = vadd.f32 %v592, %v693
      %v695 = vpop.f32.mrb[0].mxu0
      %v696 = vadd.f32 %v597, %v695
      %v697 = vpop.f32.mrb[0].mxu0
      %v698 = vadd.f32 %v597, %v697
      %699 = vdwg.mxu0
      %v700 = vxor.u32 %v682, 2147483648
      %v701 = vxor.u32 %v684, 2147483648
      %v702 = vxor.u32 %v686, 2147483648
      %v703 = vxor.u32 %v688, 2147483648
      %v704 = vxor.u32 %v692, 2147483648
      %v705 = vxor.u32 %v694, 2147483648
      %v706 = vxor.u32 %v696, 2147483648
      %v707 = vxor.u32 %v698, 2147483648
      %v708 = vmul.f32 %v700, 1.442695
      %v709 = vpow.pop %v708
      %v710 = vmul.f32 %v701, 1.442695
      %v711 = vpow.pop %v710
      %v712 = vmul.f32 %v702, 1.442695
      %v713 = vpow.pop %v712
      %v714 = vmul.f32 %v703, 1.442695
      %v715 = vpow.pop %v714
      %v716 = vmul.f32 %v704, 1.442695
      %v717 = vpow.pop %v716
      %v718 = vmul.f32 %v705, 1.442695
      %v719 = vpow.pop %v718
      %v720 = vmul.f32 %v706, 1.442695
      %v721 = vpow.pop %v720
      %v722 = vmul.f32 %v707, 1.442695
      %v723 = vpow.pop %v722
      %v724 = vadd.f32 %v709, 1.0
      %v725 = vadd.f32 %v711, 1.0
      %v726 = vadd.f32 %v713, 1.0
      %v727 = vadd.f32 %v715, 1.0
      %v728 = vadd.f32 %v717, 1.0
      %v729 = vadd.f32 %v719, 1.0
      %v730 = vadd.f32 %v721, 1.0
      %v731 = vadd.f32 %v723, 1.0
      %v732 = vrcp.pop %v724
      %v733 = vmul.f32 1.0, %v732
      %v734 = vrcp.pop %v725
      %v735 = vmul.f32 1.0, %v734
      %v736 = vrcp.pop %v726
      %v737 = vmul.f32 1.0, %v736
      %v738 = vrcp.pop %v727
      %v739 = vmul.f32 1.0, %v738
      %v740 = vrcp.pop %v728
      %v741 = vmul.f32 1.0, %v740
      %v742 = vrcp.pop %v729
      %v743 = vmul.f32 1.0, %v742
      %v744 = vrcp.pop %v730
      %v745 = vmul.f32 1.0, %v744
      %v746 = vrcp.pop %v731
      %v747 = vmul.f32 1.0, %v746
      %v748 = vmul.f32 %v682, %v733
      %v749 = vmul.f32 %v684, %v735
      %v750 = vmul.f32 %v686, %v737
      %v751 = vmul.f32 %v688, %v739
      %v752 = vmul.f32 %v692, %v741
      %v753 = vmul.f32 %v694, %v743
      %v754 = vmul.f32 %v696, %v745
      %v755 = vmul.f32 %v698, %v747
      %v756 = vld [vmem:[%s4] sm:$0xf]
      %v757 = vld [vmem:[%s4 + $0x4] sm:$0xf]
      %v758 = vpack.c.bf16 %v750, %v748
      %v759 = vpack.c.bf16 %v751, %v749
      %v760 = vpack.c.bf16 %v754, %v752
      %v761 = vpack.c.bf16 %v755, %v753
      %v762 = vld [vmem:[%s5] sm:$0xff]
      %v763 = vld [vmem:[%s5 + $0x8] sm:$0xff]
      %765 = vset.pattern.permute.xlu0 0
      %766 = vperm.xlu0 %765, %v762
      %v767 = vpop.permute.xlu0 %766
      %770 = vset.pattern.permute.xlu0 0
      %771 = vperm.xlu0 %770, %v763
      %v772 = vpop.permute.xlu0 %771
      %v776 = vunpack.c.l.b16 %v756
      %v777 = vunpack.c.l.b16 %v757
      %v778 = vpack.c.b16 %v777, %v776
      %vm779 = vcmask 261120
      %v781 = vsel %vm779, %v778, 0
      %783 = vmatprep.subr.bf16.mxu0 %v759
      %784 = vmatpush1.bf16.msra.mxu0 %v758
      %785 = vmatprep.subr.bf16.mxu0 %v761
      %786 = vmatpush1.bf16.msra.mxu0 %v760
      %787 = vmatprep.subr.bf16.mxu0 0
      %788 = vmatpush1.bf16.msra.mxu0 0
      %789 = vmatprep.subr.bf16.mxu0 0
      %790 = vmatpush1.bf16.msra.mxu0 0
      %791 = vmatprep.subr.bf16.mxu0 0
      %792 = vmatpush1.bf16.msra.mxu0 0
      %793 = vmatprep.subr.bf16.mxu0 0
      %794 = vmatpush1.bf16.msra.mxu0 0
      %795 = vmatprep.subr.bf16.mxu0 0
      %796 = vmatpush1.bf16.msra.mxu0 0
      %797 = vmatprep.subr.bf16.mxu0 0
      %798 = vmatpush1.bf16.msra.mxu0 0
      %799 = vmatprep.subr.bf16.mxu0 0
      %800 = vmatpush1.bf16.msra.mxu0 0
      %801 = vmatprep.subr.bf16.mxu0 0
      %802 = vmatpush1.bf16.msra.mxu0 0
      %803 = vmatprep.subr.bf16.mxu0 0
      %804 = vmatpush1.bf16.msra.mxu0 0
      %805 = vmatprep.subr.bf16.mxu0 0
      %806 = vmatpush1.bf16.msra.mxu0 0
      %807 = vmatprep.subr.bf16.mxu0 0
      %808 = vmatpush1.bf16.msra.mxu0 0
      %809 = vmatprep.subr.bf16.mxu0 0
      %810 = vmatpush1.bf16.msra.mxu0 0
      %811 = vmatprep.subr.bf16.mxu0 0
      %812 = vmatpush1.bf16.msra.mxu0 0
      %813 = vmatprep.subr.bf16.mxu0 0
      %814 = vmatpush1.bf16.msra.mxu0 0
      %815 = vmatprep.mubr.bf16.mxu0 0
      %816 = vmatmul.mubr.bf16.gmra.mrb[0].mxu0 %v781
      %v817 = vpop.f32.mrb[0].mxu0
      %v818 = vadd.f32 %v767, %v817
      %v819 = vpop.f32.mrb[0].mxu0
      %v820 = vadd.f32 %v767, %v819
      %v821 = vpop.f32.mrb[0].mxu0
      %v822 = vadd.f32 %v772, %v821
      %v823 = vpop.f32.mrb[0].mxu0
      %v824 = vadd.f32 %v772, %v823
      %825 = vdwg.mxu0
      %v826 = vmax.f32 %v822, -30.0
      %v827 = vmax.f32 %v824, -30.0
      %v828 = vmin.f32 %v826, 20.0
      %v829 = vmin.f32 %v827, 20.0
      %v830 = vmul.f32 %v828, 0.5
      %v831 = vmul.f32 %v829, 0.5
      %v832 = vmul.f32 %v830, 1.442695
      %v833 = vpow.pop %v832
      %v834 = vmul.f32 %v831, 1.442695
      %v835 = vpow.pop %v834
      %v836 = vld [vmem:[%s293] sm:$0xff]
      %v837 = vunpack.c.l.bf16 %v836
      %v838 = vunpack.c.h.bf16 %v836
      %v839 = vmul.f32 %v837, %v833
      %v840 = vmul.f32 %v838, %v835
      %v841 = vadd.f32 %v818, %v839
      %v842 = vadd.f32 %v820, %v840
      %843 = vst [vmem:[%s298] sm:$0xff] %v841
      %844 = vst [vmem:[%s298 + $0x8] sm:$0xff] %v842
      %p845 = scmp.lt.s32.totalorder %s18, 1
      %s846 = scalar_select %p845, %s18, 1
      %s847 = smul.addr %s846, 2
      %s848 = smul.addr %s847, 8
      %s849 = scalar_lea.vmem %s7, %s848
      // Predicated region
      $region49: #{stage1_wrapper_forward.1} parent=47 // pred_check
        %p850 = pneg %p193
      $region50: #{stage1_wrapper_forward.1} parent=47 // pred_check_branch
        %852 = sbr.rel (%p850) target = $region52
      $region51: #{stage1_wrapper_forward.1} parent=47 // pred_region
        _
      $region52: #{stage1_wrapper_forward.1} parent=47 // pred_fallthru
        _
    $region48: #{stage1_wrapper_forward.1} parent=5 // pred_fallthru
      _
    %p853 = scmp.le.s32.totalorder 2, %s13
    // Predicated region
    $region53: #{stage1_wrapper_forward.1} parent=5 // pred_check
      %p854 = pneg %p853
    $region54: #{stage1_wrapper_forward.1} parent=5 // pred_check_branch
      %856 = sbr.rel (%p854) target = $region56
    $region55: #{stage1_wrapper_forward.1} parent=5 // pred_region
      %s857 = ssub.s32 %s13, 2
      // Predicated region
      $region57: #{stage1_wrapper_forward.1} parent=55 // pred_check
        %p858 = pneg %p199
      $region58: #{stage1_wrapper_forward.1} parent=55 // pred_check_branch
        %860 = sbr.rel (%p858) target = $region60
      $region59: #{stage1_wrapper_forward.1} parent=55 // pred_region
        %p861 = scmp.lt.s32.totalorder %s19, 1
        %s862 = scalar_select %p861, %s19, 1
        %s863 = smul.addr %s862, 2
        %s864 = smul.addr %s863, 8
        %s865 = scalar_lea.vmem %s7, %s864
      $region60: #{stage1_wrapper_forward.1} parent=55 // pred_fallthru
        _
    $region56: #{stage1_wrapper_forward.1} parent=5 // pred_fallthru
      _
  $region6: #{stage1_wrapper_forward.1} parent=0 // loop_footer
    %s17 = sadd.s32 1, %s13
  $region7: #{stage1_wrapper_forward.1} parent=0 // loop_footer_branch
    %12 = sbr.rel target = $region3
  $region8: #{stage1_wrapper_forward.1} parent=0 // loop_exit
    _

</llo_original>
